<compile_context>
chip_gen: v7x
topology: tpu7x:2x2x1
jax: 0.10.0
libtpu: 0.0.40
codegen_flags: <defaults>
</compile_context>

<pallas_src>
import functools

import jax
import jax.numpy as jnp
from jax.experimental import pallas as pl
from jax.experimental.pallas import tpu as pltpu


TILE_M_MAX = 2048  # rows per grid step (multiple of 8); ~10 MiB lane-padded VMEM/step


def _mlp_kernel(x_ref, w1_ref, b1_ref, w2_ref, b2_ref, w3_ref, b3_ref, o_ref):
    # x_ref: (tm, 6) f32      w1: (6,128) bf16   b1: (1,128) f32
    # w2: (128,64) bf16       b2: (1,64)  f32    w3: (64,12) bf16  b3: (1,12) f32
    x = x_ref[...].astype(jnp.bfloat16)

    h1 = jnp.dot(x, w1_ref[...], preferred_element_type=jnp.float32) + b1_ref[...]
    h1 = jnp.maximum(h1, 0.0).astype(jnp.bfloat16)

    h2 = jnp.dot(h1, w2_ref[...], preferred_element_type=jnp.float32) + b2_ref[...]
    h2 = jnp.maximum(h2, 0.0).astype(jnp.bfloat16)

    h3 = jnp.dot(h2, w3_ref[...], preferred_element_type=jnp.float32) + b3_ref[...]
    o_ref[...] = h3.astype(o_ref.dtype)


def _run_mlp_2d(x2d, params):
    w1, b1, w2, b2, w3, b3 = params
    M = x2d.shape[0]

    # Pad rows only up to the next multiple of 8 (sublane granularity); the last
    # grid block may be partial — Pallas masks the out-of-bounds part.
    M_pad = ((M + 7) // 8) * 8
    if M_pad != M:
        x2d = jnp.pad(x2d, ((0, M_pad - M), (0, 0)))

    tile_m = min(TILE_M_MAX, M_pad)
    grid = (pl.cdiv(M_pad, tile_m),)

    # Weights in bf16 (fused cast under jit); biases stay f32 for the f32-acc add.
    w1b = w1.astype(jnp.bfloat16)
    w2b = w2.astype(jnp.bfloat16)
    w3b = w3.astype(jnp.bfloat16)

    out = pl.pallas_call(
        _mlp_kernel,
        out_shape=jax.ShapeDtypeStruct((M_pad, 12), jnp.float32),
        grid_spec=pltpu.PrefetchScalarGridSpec(
            num_scalar_prefetch=0,
            grid=grid,
            in_specs=[
                pl.BlockSpec((tile_m, 6), lambda i: (i, 0)),   # x tile (streamed)
                pl.BlockSpec((6, 128), lambda i: (0, 0)),      # w1 (resident)
                pl.BlockSpec((1, 128), lambda i: (0, 0)),      # b1
                pl.BlockSpec((128, 64), lambda i: (0, 0)),     # w2
                pl.BlockSpec((1, 64), lambda i: (0, 0)),       # b2
                pl.BlockSpec((64, 12), lambda i: (0, 0)),      # w3
                pl.BlockSpec((1, 12), lambda i: (0, 0)),       # b3
            ],
            out_specs=pl.BlockSpec((tile_m, 12), lambda i: (i, 0)),
        ),
        compiler_params=pltpu.CompilerParams(
            dimension_semantics=("parallel",),      # megacore sharding on v7x
            vmem_limit_bytes=32 * 1024 * 1024,      # lane-padded budget headroom
        ),
    )(x2d, w1b, b1, w2b, b2, w3b, b3)
    return out[:M]


@functools.partial(jax.jit, static_argnames=())
def imu_noise_model_forward(x, params):
    """Mirrors the PyTorch forward: optional squeeze(1) if 5-D, then MLP over last dim (=6)."""
    if x.ndim == 5:
        # torch .squeeze(1) only removes the dim if it is size 1
        if x.shape[1] == 1:
            x = jnp.squeeze(x, axis=1)
    lead_shape = x.shape[:-1]
    x2d = x.reshape((-1, x.shape[-1]))
    out2d = _run_mlp_2d(x2d, params)
    return out2d.reshape(lead_shape + (12,))


def init_params(key):
    """Deterministic init; weights stored as (in, out), biases as (1, out)."""
    ks = jax.random.split(key, 6)

    def lin(kw, kb, fan_in, fan_out):
        bound = 1.0 / jnp.sqrt(fan_in)
        w = jax.random.uniform(kw, (fan_in, fan_out), jnp.float32, -bound, bound)
        b = jax.random.uniform(kb, (1, fan_out), jnp.float32, -bound, bound)
        return w, b

    w1, b1 = lin(ks[0], ks[1], 6, 128)
    w2, b2 = lin(ks[2], ks[3], 128, 64)
    w3, b3 = lin(ks[4], ks[5], 64, 12)
    return (w1, b1, w2, b2, w3, b3)


def _reference_forward(x, params):
    """Pure-JAX reference mirroring the kernel's bf16-input / f32-accumulate arithmetic."""
    w1, b1, w2, b2, w3, b3 = params
    if x.ndim == 5 and x.shape[1] == 1:
        x = jnp.squeeze(x, axis=1)
    w1b = w1.astype(jnp.bfloat16)
    w2b = w2.astype(jnp.bfloat16)
    w3b = w3.astype(jnp.bfloat16)
    h = x.astype(jnp.bfloat16)
    h = jnp.maximum(jnp.dot(h, w1b, preferred_element_type=jnp.float32) + b1, 0.0)
    h = h.astype(jnp.bfloat16)
    h = jnp.maximum(jnp.dot(h, w2b, preferred_element_type=jnp.float32) + b2, 0.0)
    h = h.astype(jnp.bfloat16)
    return jnp.dot(h, w3b, preferred_element_type=jnp.float32) + b3


if __name__ == "__main__":
    key = jax.random.PRNGKey(0)
    k_param, k_x, k_x2 = jax.random.split(key, 3)
    params = init_params(k_param)

    # Small IMU-like input: (batch=2, extra dim=1, 4, 8, channels=6) -> exercises the 5-D path.
    x = jax.random.normal(k_x, (2, 1, 4, 8, 6), dtype=jnp.float32)
    out = imu_noise_model_forward(x, params)
    out = jax.block_until_ready(out)

    ref = _reference_forward(x, params)
    assert out.shape == (2, 4, 8, 12), out.shape
    assert jnp.allclose(out, ref, atol=1e-3, rtol=1e-3), "mismatch vs reference (5-D path)"

    # Second case: 3-D input, M=2100 rows -> exercises row padding + multi-tile grid
    # (tile_m=2048, partial last block) path.
    x2 = jax.random.normal(k_x2, (3, 700, 6), dtype=jnp.float32)
    out2 = imu_noise_model_forward(x2, params)
    out2 = jax.block_until_ready(out2)

    ref2 = _reference_forward(x2, params)
    assert out2.shape == (3, 700, 12), out2.shape
    assert jnp.allclose(out2, ref2, atol=1e-3, rtol=1e-3), "mismatch vs reference (3-D path)"

    print("KERNEL_OK")
</pallas_src>

<mosaic_0001>
module attributes {stable_mosaic.version = 11 : i64} {
  func.func @_mlp_kernel(%arg0: i32, %arg1: memref<64x6xf32, #tpu.memory_space<vmem>>, %arg2: memref<6x128xbf16, #tpu.memory_space<vmem>>, %arg3: memref<1x128xf32, #tpu.memory_space<vmem>>, %arg4: memref<128x64xbf16, #tpu.memory_space<vmem>>, %arg5: memref<1x64xf32, #tpu.memory_space<vmem>>, %arg6: memref<64x12xbf16, #tpu.memory_space<vmem>>, %arg7: memref<1x12xf32, #tpu.memory_space<vmem>>, %arg8: memref<64x12xf32, #tpu.memory_space<vmem>>) attributes {dimension_semantics = [#tpu.dimension_semantics<parallel>], iteration_bounds = array<i64: 1>, scalar_prefetch = 0 : i64, scratch_operands = 0 : i64, tpu.core_type = #tpu.core_type<tc>, window_params = [{transform_indices = @transform_0, window_bounds = array<i64: 64, 6>}, {pipeline_mode = #tpu.pipeline_mode<synchronous>, transform_indices = @transform_1, window_bounds = array<i64: 6, 128>}, {pipeline_mode = #tpu.pipeline_mode<synchronous>, transform_indices = @transform_2, window_bounds = array<i64: 1, 128>}, {pipeline_mode = #tpu.pipeline_mode<synchronous>, transform_indices = @transform_3, window_bounds = array<i64: 128, 64>}, {pipeline_mode = #tpu.pipeline_mode<synchronous>, transform_indices = @transform_4, window_bounds = array<i64: 1, 64>}, {pipeline_mode = #tpu.pipeline_mode<synchronous>, transform_indices = @transform_5, window_bounds = array<i64: 64, 12>}, {pipeline_mode = #tpu.pipeline_mode<synchronous>, transform_indices = @transform_6, window_bounds = array<i64: 1, 12>}, {transform_indices = @transform_7, window_bounds = array<i64: 64, 12>}]} {
    %c0 = arith.constant 0 : index
    %c0_0 = arith.constant 0 : index
    %0 = vector.load %arg1[%c0, %c0_0] : memref<64x6xf32, #tpu.memory_space<vmem>>, vector<64x6xf32>
    %1 = arith.truncf %0 : vector<64x6xf32> to vector<64x6xbf16>
    %c0_1 = arith.constant 0 : index
    %c0_2 = arith.constant 0 : index
    %2 = vector.load %arg2[%c0_1, %c0_2] : memref<6x128xbf16, #tpu.memory_space<vmem>>, vector<6x128xbf16>
    %cst = arith.constant dense<0.000000e+00> : vector<64x128xf32>
    %3 = tpu.matmul %1, %2, %cst {dimension_numbers = #tpu.dot_dimension_numbers<[1], [0], [0], [1], [0, 0, 1, 1], [], []>} : vector<64x6xbf16>, vector<6x128xbf16>, vector<64x128xf32> -> vector<64x128xf32>
    %c0_3 = arith.constant 0 : index
    %c0_4 = arith.constant 0 : index
    %4 = vector.load %arg3[%c0_3, %c0_4] : memref<1x128xf32, #tpu.memory_space<vmem>>, vector<1x128xf32>
    %5 = vector.broadcast %4 : vector<1x128xf32> to vector<64x128xf32>
    %6 = arith.addf %3, %5 : vector<64x128xf32>
    %cst_5 = arith.constant 0.000000e+00 : f32
    %7 = vector.broadcast %cst_5 : f32 to vector<64x128xf32>
    %8 = arith.maximumf %6, %7 : vector<64x128xf32>
    %9 = arith.truncf %8 : vector<64x128xf32> to vector<64x128xbf16>
    %c0_6 = arith.constant 0 : index
    %c0_7 = arith.constant 0 : index
    %10 = vector.load %arg4[%c0_6, %c0_7] : memref<128x64xbf16, #tpu.memory_space<vmem>>, vector<128x64xbf16>
    %cst_8 = arith.constant dense<0.000000e+00> : vector<64x64xf32>
    %11 = tpu.matmul %9, %10, %cst_8 {dimension_numbers = #tpu.dot_dimension_numbers<[1], [0], [0], [1], [0, 0, 1, 1], [], []>} : vector<64x128xbf16>, vector<128x64xbf16>, vector<64x64xf32> -> vector<64x64xf32>
    %c0_9 = arith.constant 0 : index
    %c0_10 = arith.constant 0 : index
    %12 = vector.load %arg5[%c0_9, %c0_10] : memref<1x64xf32, #tpu.memory_space<vmem>>, vector<1x64xf32>
    %13 = vector.broadcast %12 : vector<1x64xf32> to vector<64x64xf32>
    %14 = arith.addf %11, %13 : vector<64x64xf32>
    %cst_11 = arith.constant 0.000000e+00 : f32
    %15 = vector.broadcast %cst_11 : f32 to vector<64x64xf32>
    %16 = arith.maximumf %14, %15 : vector<64x64xf32>
    %17 = arith.truncf %16 : vector<64x64xf32> to vector<64x64xbf16>
    %c0_12 = arith.constant 0 : index
    %c0_13 = arith.constant 0 : index
    %18 = vector.load %arg6[%c0_12, %c0_13] : memref<64x12xbf16, #tpu.memory_space<vmem>>, vector<64x12xbf16>
    %cst_14 = arith.constant dense<0.000000e+00> : vector<64x12xf32>
    %19 = tpu.matmul %17, %18, %cst_14 {dimension_numbers = #tpu.dot_dimension_numbers<[1], [0], [0], [1], [0, 0, 1, 1], [], []>} : vector<64x64xbf16>, vector<64x12xbf16>, vector<64x12xf32> -> vector<64x12xf32>
    %c0_15 = arith.constant 0 : index
    %c0_16 = arith.constant 0 : index
    %20 = vector.load %arg7[%c0_15, %c0_16] : memref<1x12xf32, #tpu.memory_space<vmem>>, vector<1x12xf32>
    %21 = vector.broadcast %20 : vector<1x12xf32> to vector<64x12xf32>
    %22 = arith.addf %19, %21 : vector<64x12xf32>
    %c0_17 = arith.constant 0 : index
    %c0_18 = arith.constant 0 : index
    %23 = vector.load %arg8[%c0_17, %c0_18] : memref<64x12xf32, #tpu.memory_space<vmem>>, vector<64x12xf32>
    tpu.vector_store %arg8[%c0_17, %c0_18], %22 {strides = array<i32>} : memref<64x12xf32, #tpu.memory_space<vmem>>, vector<64x12xf32>,
    return
  }
  func.func @transform_0(%arg0: i32) -> (i32, i32) {
    %c0_i32 = arith.constant 0 : i32
    %c0_i32_0 = arith.constant 0 : i32
    return %arg0, %c0_i32 : i32, i32
  }
  func.func @transform_1(%arg0: i32) -> (i32, i32) {
    %c0_i32 = arith.constant 0 : i32
    %c0_i32_0 = arith.constant 0 : i32
    %c0_i32_1 = arith.constant 0 : i32
    return %c0_i32, %c0_i32_0 : i32, i32
  }
  func.func @transform_2(%arg0: i32) -> (i32, i32) {
    %c0_i32 = arith.constant 0 : i32
    %c0_i32_0 = arith.constant 0 : i32
    %c0_i32_1 = arith.constant 0 : i32
    return %c0_i32, %c0_i32_0 : i32, i32
  }
  func.func @transform_3(%arg0: i32) -> (i32, i32) {
    %c0_i32 = arith.constant 0 : i32
    %c0_i32_0 = arith.constant 0 : i32
    %c0_i32_1 = arith.constant 0 : i32
    return %c0_i32, %c0_i32_0 : i32, i32
  }
  func.func @transform_4(%arg0: i32) -> (i32, i32) {
    %c0_i32 = arith.constant 0 : i32
    %c0_i32_0 = arith.constant 0 : i32
    %c0_i32_1 = arith.constant 0 : i32
    return %c0_i32, %c0_i32_0 : i32, i32
  }
  func.func @transform_5(%arg0: i32) -> (i32, i32) {
    %c0_i32 = arith.constant 0 : i32
    %c0_i32_0 = arith.constant 0 : i32
    %c0_i32_1 = arith.constant 0 : i32
    return %c0_i32, %c0_i32_0 : i32, i32
  }
  func.func @transform_6(%arg0: i32) -> (i32, i32) {
    %c0_i32 = arith.constant 0 : i32
    %c0_i32_0 = arith.constant 0 : i32
    %c0_i32_1 = arith.constant 0 : i32
    return %c0_i32, %c0_i32_0 : i32, i32
  }
  func.func @transform_7(%arg0: i32) -> (i32, i32) {
    %c0_i32 = arith.constant 0 : i32
    %c0_i32_0 = arith.constant 0 : i32
    return %arg0, %c0_i32 : i32, i32
  }
}

</mosaic_0001>

<llo_original>
// kernel: imu_noise_model_forward.1
$region0: #{imu_noise_model_forward.1}
  #allocation0 [shape = 'u32[]', space=smem, size = 0x4, offset = 0x4, fixed_abs, tag = 'smem constant byte address 0x4 - core index']
  #allocation1 [shape = 'u32[144,128]{1,0:T(1,128)}', space=vmem, size = 0x12000, scoped, tag = 'internal scratch']
  %s0 = inlined_call_operand.vmem [shape: f32[64,6], index: 0, kind: input, shape index: {}]
  %s1 = inlined_call_operand.vmem [shape: bf16[6,128], index: 1, kind: input, shape index: {}]
  %s2 = inlined_call_operand.vmem [shape: f32[1,128], index: 2, kind: input, shape index: {}]
  %s3 = inlined_call_operand.vmem [shape: bf16[128,64], index: 3, kind: input, shape index: {}]
  %s4 = inlined_call_operand.vmem [shape: f32[1,64], index: 4, kind: input, shape index: {}]
  %s5 = inlined_call_operand.vmem [shape: bf16[64,12], index: 5, kind: input, shape index: {}]
  %s6 = inlined_call_operand.vmem [shape: f32[1,12], index: 6, kind: input, shape index: {}]
  %s7 = inlined_call_operand.hbm [shape: f32[64,12], index: 7, kind: output, shape index: {}]
  %s8 = sld [smem:[#allocation0]]
  $region38: #{imu_noise_model_forward.1} parent=0
    _
  %s10 = ssub.s32 1, %s8
  %s11 = scalar_select 0, %s10, %s8
  $region1: #{imu_noise_model_forward.1} parent=0
    #allocation2 [shape = 'u8[32768]{0}', space=vmem, size = 0x8000, scoped, tag = 'output window, operand 0, single buffered']
    #allocation3 [shape = 's32[1]{0}', space=sflag, size = 0x4, scoped, tag = 'scoped memory for imu_noise_model_forward.1']
    %12 = vsyncpa [#allocation3], 0
    // Predicated region
    $region2: #{imu_noise_model_forward.1} parent=1 // pred_check
      _
    $region3: #{imu_noise_model_forward.1} parent=1 // pred_check_branch
      %14 = sbr.rel (0) target = $region5
    $region4: #{imu_noise_model_forward.1} parent=1 // pred_region
      _
    $region5: #{imu_noise_model_forward.1} parent=1 // pred_fallthru
      _
    // Predicated region
    $region6: #{imu_noise_model_forward.1} parent=1 // pred_check
      _
    $region7: #{imu_noise_model_forward.1} parent=1 // pred_check_branch
      %16 = sbr.rel (0) target = $region9
    $region8: #{imu_noise_model_forward.1} parent=1 // pred_region
      _
    $region9: #{imu_noise_model_forward.1} parent=1 // pred_fallthru
      _
    // Predicated region
    $region10: #{imu_noise_model_forward.1} parent=1 // pred_check
      _
    $region11: #{imu_noise_model_forward.1} parent=1 // pred_check_branch
      %18 = sbr.rel (0) target = $region13
    $region12: #{imu_noise_model_forward.1} parent=1 // pred_region
      _
    $region13: #{imu_noise_model_forward.1} parent=1 // pred_fallthru
      _
    // Predicated region
    $region14: #{imu_noise_model_forward.1} parent=1 // pred_check
      _
    $region15: #{imu_noise_model_forward.1} parent=1 // pred_check_branch
      %20 = sbr.rel (0) target = $region17
    $region16: #{imu_noise_model_forward.1} parent=1 // pred_region
      _
    $region17: #{imu_noise_model_forward.1} parent=1 // pred_fallthru
      _
    // Predicated region
    $region18: #{imu_noise_model_forward.1} parent=1 // pred_check
      _
    $region19: #{imu_noise_model_forward.1} parent=1 // pred_check_branch
      %22 = sbr.rel (0) target = $region21
    $region20: #{imu_noise_model_forward.1} parent=1 // pred_region
      _
    $region21: #{imu_noise_model_forward.1} parent=1 // pred_fallthru
      _
    // Predicated region
    $region22: #{imu_noise_model_forward.1} parent=1 // pred_check
      _
    $region23: #{imu_noise_model_forward.1} parent=1 // pred_check_branch
      %24 = sbr.rel (0) target = $region25
    $region24: #{imu_noise_model_forward.1} parent=1 // pred_region
      _
    $region25: #{imu_noise_model_forward.1} parent=1 // pred_fallthru
      _
    // Predicated region
    $region26: #{imu_noise_model_forward.1} parent=1 // pred_check
      _
    $region27: #{imu_noise_model_forward.1} parent=1 // pred_check_branch
      %26 = sbr.rel (0) target = $region29
    $region28: #{imu_noise_model_forward.1} parent=1 // pred_region
      _
    $region29: #{imu_noise_model_forward.1} parent=1 // pred_fallthru
      _
    %v28 = vld [vmem:[%s0] sm:$0xff]
    %v29 = vld [vmem:[%s0 + $0x8] sm:$0xff]
    %v30 = vld [vmem:[%s0 + $0x10] sm:$0xff]
    %v31 = vld [vmem:[%s0 + $0x18] sm:$0xff]
    %v32 = vld [vmem:[%s0 + $0x20] sm:$0xff]
    %v33 = vld [vmem:[%s0 + $0x28] sm:$0xff]
    %v34 = vld [vmem:[%s0 + $0x30] sm:$0xff]
    %v35 = vld [vmem:[%s0 + $0x38] sm:$0xff]
    %v36 = vpack.c.bf16 %v29, %v28
    %v37 = vpack.c.bf16 %v31, %v30
    %v38 = vpack.c.bf16 %v33, %v32
    %v39 = vpack.c.bf16 %v35, %v34
    %v40 = vld [vmem:[%s1] sm:$0x7]
    %v41 = vld [vmem:[%s2] sm:$0x1]
    %v43 = vlaneseq
    %v44 = vshrl.u32 %v43, 7
    %v45 = vsub.s32 0, %v44
    %v46 = vrot.slane %v41, %v45
    %vm48 = vcmask 48128
    %v50 = vsel %vm48, %v36, 0
    %v53 = vsel %vm48, %v37, 0
    %v56 = vsel %vm48, %v38, 0
    %v59 = vsel %vm48, %v39, 0
    %vm61 = vcmask 1042432
    %v63 = vsel %vm61, %v40, 0
    %65 = vmatprep.subr.bf16.mxu0 0
    %66 = vmatpush1.bf16.msra.mxu0 %v63
    %67 = vmatprep.subr.bf16.mxu0 0
    %68 = vmatpush1.bf16.msra.mxu0 0
    %69 = vmatprep.subr.bf16.mxu0 0
    %70 = vmatpush1.bf16.msra.mxu0 0
    %71 = vmatprep.subr.bf16.mxu0 0
    %72 = vmatpush1.bf16.msra.mxu0 0
    %73 = vmatprep.subr.bf16.mxu0 0
    %74 = vmatpush1.bf16.msra.mxu0 0
    %75 = vmatprep.subr.bf16.mxu0 0
    %76 = vmatpush1.bf16.msra.mxu0 0
    %77 = vmatprep.subr.bf16.mxu0 0
    %78 = vmatpush1.bf16.msra.mxu0 0
    %79 = vmatprep.subr.bf16.mxu0 0
    %80 = vmatpush1.bf16.msra.mxu0 0
    %81 = vmatprep.subr.bf16.mxu0 0
    %82 = vmatpush1.bf16.msra.mxu0 0
    %83 = vmatprep.subr.bf16.mxu0 0
    %84 = vmatpush1.bf16.msra.mxu0 0
    %85 = vmatprep.subr.bf16.mxu0 0
    %86 = vmatpush1.bf16.msra.mxu0 0
    %87 = vmatprep.subr.bf16.mxu0 0
    %88 = vmatpush1.bf16.msra.mxu0 0
    %89 = vmatprep.subr.bf16.mxu0 0
    %90 = vmatpush1.bf16.msra.mxu0 0
    %91 = vmatprep.subr.bf16.mxu0 0
    %92 = vmatpush1.bf16.msra.mxu0 0
    %93 = vmatprep.subr.bf16.mxu0 0
    %94 = vmatpush1.bf16.msra.mxu0 0
    %95 = vmatprep.subr.bf16.mxu0 0
    %96 = vmatpush1.bf16.msra.mxu0 0
    %97 = vmatprep.mubr.bf16.mxu0 0
    %98 = vmatmul.mubr.bf16.gmra.mrb[0].mxu0 %v50
    %v99 = vpop.f32.mrb[0].mxu0
    %v100 = vadd.f32 %v46, %v99
    %v101 = vpop.f32.mrb[0].mxu0
    %v102 = vpop.f32.mrb[0].mxu0
    %v103 = vadd.f32 %v46, %v102
    %v104 = vpop.f32.mrb[0].mxu0
    %105 = vmatprep.mubr.bf16.mxu0 0
    %106 = vmatmul.mubr.bf16.gmra.mrb[0].mxu0 %v53
    %v107 = vpop.f32.mrb[0].mxu0
    %v108 = vadd.f32 %v46, %v107
    %v109 = vpop.f32.mrb[0].mxu0
    %v110 = vpop.f32.mrb[0].mxu0
    %v111 = vadd.f32 %v46, %v110
    %v112 = vpop.f32.mrb[0].mxu0
    %113 = vmatprep.mubr.bf16.mxu0 0
    %114 = vmatmul.mubr.bf16.gmra.mrb[0].mxu0 %v56
    %v115 = vpop.f32.mrb[0].mxu0
    %v116 = vadd.f32 %v46, %v115
    %v117 = vpop.f32.mrb[0].mxu0
    %v118 = vpop.f32.mrb[0].mxu0
    %v119 = vadd.f32 %v46, %v118
    %v120 = vpop.f32.mrb[0].mxu0
    %121 = vmatprep.mubr.bf16.mxu0 0
    %122 = vmatmul.mubr.bf16.gmra.mrb[0].mxu0 %v59
    %v123 = vpop.f32.mrb[0].mxu0
    %v124 = vadd.f32 %v46, %v123
    %v125 = vpop.f32.mrb[0].mxu0
    %v126 = vpop.f32.mrb[0].mxu0
    %v127 = vadd.f32 %v46, %v126
    %v128 = vpop.f32.mrb[0].mxu0
    %129 = vdwg.mxu0
    %v130 = vmax.f32 %v100, 0.0
    %v131 = vmax.f32 %v103, 0.0
    %v132 = vmax.f32 %v108, 0.0
    %v133 = vmax.f32 %v111, 0.0
    %v134 = vmax.f32 %v116, 0.0
    %v135 = vmax.f32 %v119, 0.0
    %v136 = vmax.f32 %v124, 0.0
    %v137 = vmax.f32 %v127, 0.0
    %v138 = vpack.c.bf16 %v131, %v130
    %v139 = vpack.c.bf16 %v133, %v132
    %v140 = vpack.c.bf16 %v135, %v134
    %v141 = vpack.c.bf16 %v137, %v136
    %v142 = vld [vmem:[%s3] sm:$0xf]
    %v143 = vld [vmem:[%s3 + $0x4] sm:$0xf]
    %v144 = vld [vmem:[%s3 + $0x8] sm:$0xf]
    %v145 = vld [vmem:[%s3 + $0xc] sm:$0xf]
    %v146 = vld [vmem:[%s3 + $0x10] sm:$0xf]
    %v147 = vld [vmem:[%s3 + $0x14] sm:$0xf]
    %v148 = vld [vmem:[%s3 + $0x18] sm:$0xf]
    %v149 = vld [vmem:[%s3 + $0x1c] sm:$0xf]
    %v150 = vld [vmem:[%s3 + $0x20] sm:$0xf]
    %v151 = vld [vmem:[%s3 + $0x24] sm:$0xf]
    %v152 = vld [vmem:[%s3 + $0x28] sm:$0xf]
    %v153 = vld [vmem:[%s3 + $0x2c] sm:$0xf]
    %v154 = vld [vmem:[%s3 + $0x30] sm:$0xf]
    %v155 = vld [vmem:[%s3 + $0x34] sm:$0xf]
    %v156 = vld [vmem:[%s3 + $0x38] sm:$0xf]
    %v157 = vld [vmem:[%s3 + $0x3c] sm:$0xf]
    %v158 = vld [vmem:[%s4] sm:$0x1]
    %v160 = vlaneseq
    %v161 = vshrl.u32 %v160, 7
    %v162 = vsub.s32 0, %v161
    %v163 = vrot.slane %v158, %v162
    %v181 = vunpack.c.l.b16 %v142
    %v182 = vunpack.c.l.b16 %v143
    %v183 = vunpack.c.l.b16 %v144
    %v184 = vunpack.c.l.b16 %v145
    %v185 = vunpack.c.l.b16 %v146
    %v186 = vunpack.c.l.b16 %v147
    %v187 = vunpack.c.l.b16 %v148
    %v188 = vunpack.c.l.b16 %v149
    %v189 = vunpack.c.l.b16 %v150
    %v190 = vunpack.c.l.b16 %v151
    %v191 = vunpack.c.l.b16 %v152
    %v192 = vunpack.c.l.b16 %v153
    %v193 = vunpack.c.l.b16 %v154
    %v194 = vunpack.c.l.b16 %v155
    %v195 = vunpack.c.l.b16 %v156
    %v196 = vunpack.c.l.b16 %v157
    %v197 = vpack.c.b16 %v182, %v181
    %v198 = vpack.c.b16 %v184, %v183
    %v199 = vpack.c.b16 %v186, %v185
    %v200 = vpack.c.b16 %v188, %v187
    %v201 = vpack.c.b16 %v190, %v189
    %v202 = vpack.c.b16 %v192, %v191
    %v203 = vpack.c.b16 %v194, %v193
    %v204 = vpack.c.b16 %v196, %v195
    %213 = vmatprep.subr.bf16.mxu0 0
    %214 = vmatpush1.bf16.msra.mxu0 %v197
    %215 = vmatprep.subr.bf16.mxu0 0
    %216 = vmatpush1.bf16.msra.mxu0 %v198
    %217 = vmatprep.subr.bf16.mxu0 0
    %218 = vmatpush1.bf16.msra.mxu0 %v199
    %219 = vmatprep.subr.bf16.mxu0 0
    %220 = vmatpush1.bf16.msra.mxu0 %v200
    %221 = vmatprep.subr.bf16.mxu0 0
    %222 = vmatpush1.bf16.msra.mxu0 %v201
    %223 = vmatprep.subr.bf16.mxu0 0
    %224 = vmatpush1.bf16.msra.mxu0 %v202
    %225 = vmatprep.subr.bf16.mxu0 0
    %226 = vmatpush1.bf16.msra.mxu0 %v203
    %227 = vmatprep.subr.bf16.mxu0 0
    %228 = vmatpush1.bf16.msra.mxu0 %v204
    %229 = vmatprep.subr.bf16.mxu0 0
    %230 = vmatpush1.bf16.msra.mxu0 0
    %231 = vmatprep.subr.bf16.mxu0 0
    %232 = vmatpush1.bf16.msra.mxu0 0
    %233 = vmatprep.subr.bf16.mxu0 0
    %234 = vmatpush1.bf16.msra.mxu0 0
    %235 = vmatprep.subr.bf16.mxu0 0
    %236 = vmatpush1.bf16.msra.mxu0 0
    %237 = vmatprep.subr.bf16.mxu0 0
    %238 = vmatpush1.bf16.msra.mxu0 0
    %239 = vmatprep.subr.bf16.mxu0 0
    %240 = vmatpush1.bf16.msra.mxu0 0
    %241 = vmatprep.subr.bf16.mxu0 0
    %242 = vmatpush1.bf16.msra.mxu0 0
    %243 = vmatprep.subr.bf16.mxu0 0
    %244 = vmatpush1.bf16.msra.mxu0 0
    %245 = vmatprep.mubr.bf16.mxu0 0
    %246 = vmatmul.mubr.bf16.gmra.mrb[0].mxu0 %v138
    %v247 = vpop.f32.mrb[0].mxu0
    %v248 = vadd.f32 %v163, %v247
    %v249 = vpop.f32.mrb[0].mxu0
    %v250 = vpop.f32.mrb[0].mxu0
    %v251 = vadd.f32 %v163, %v250
    %v252 = vpop.f32.mrb[0].mxu0
    %253 = vmatprep.mubr.bf16.mxu0 0
    %254 = vmatmul.mubr.bf16.gmra.mrb[0].mxu0 %v139
    %v255 = vpop.f32.mrb[0].mxu0
    %v256 = vadd.f32 %v163, %v255
    %v257 = vpop.f32.mrb[0].mxu0
    %v258 = vpop.f32.mrb[0].mxu0
    %v259 = vadd.f32 %v163, %v258
    %v260 = vpop.f32.mrb[0].mxu0
    %261 = vmatprep.mubr.bf16.mxu0 0
    %262 = vmatmul.mubr.bf16.gmra.mrb[0].mxu0 %v140
    %v263 = vpop.f32.mrb[0].mxu0
    %v264 = vadd.f32 %v163, %v263
    %v265 = vpop.f32.mrb[0].mxu0
    %v266 = vpop.f32.mrb[0].mxu0
    %v267 = vadd.f32 %v163, %v266
    %v268 = vpop.f32.mrb[0].mxu0
    %269 = vmatprep.mubr.bf16.mxu0 0
    %270 = vmatmul.mubr.bf16.gmra.mrb[0].mxu0 %v141
    %v271 = vpop.f32.mrb[0].mxu0
    %v272 = vadd.f32 %v163, %v271
    %v273 = vpop.f32.mrb[0].mxu0
    %v274 = vpop.f32.mrb[0].mxu0
    %v275 = vadd.f32 %v163, %v274
    %v276 = vpop.f32.mrb[0].mxu0
    %277 = vdwg.mxu0
    %v278 = vmax.f32 %v248, 0.0
    %v279 = vmax.f32 %v251, 0.0
    %v280 = vmax.f32 %v256, 0.0
    %v281 = vmax.f32 %v259, 0.0
    %v282 = vmax.f32 %v264, 0.0
    %v283 = vmax.f32 %v267, 0.0
    %v284 = vmax.f32 %v272, 0.0
    %v285 = vmax.f32 %v275, 0.0
    %v286 = vpack.c.bf16 %v279, %v278
    %v287 = vpack.c.bf16 %v281, %v280
    %v288 = vpack.c.bf16 %v283, %v282
    %v289 = vpack.c.bf16 %v285, %v284
    %v290 = vld [vmem:[%s5] sm:$0xf]
    %v291 = vld [vmem:[%s5 + $0x4] sm:$0xf]
    %v292 = vld [vmem:[%s5 + $0x8] sm:$0xf]
    %v293 = vld [vmem:[%s5 + $0xc] sm:$0xf]
    %v294 = vld [vmem:[%s5 + $0x10] sm:$0xf]
    %v295 = vld [vmem:[%s5 + $0x14] sm:$0xf]
    %v296 = vld [vmem:[%s5 + $0x18] sm:$0xf]
    %v297 = vld [vmem:[%s5 + $0x1c] sm:$0xf]
    %v298 = vld [vmem:[%s6] sm:$0x1]
    %v300 = vlaneseq
    %v301 = vshrl.u32 %v300, 7
    %v302 = vsub.s32 0, %v301
    %v303 = vrot.slane %v298, %v302
    %v313 = vunpack.c.l.b16 %v290
    %v314 = vunpack.c.l.b16 %v291
    %v315 = vunpack.c.l.b16 %v292
    %v316 = vunpack.c.l.b16 %v293
    %v317 = vunpack.c.l.b16 %v294
    %v318 = vunpack.c.l.b16 %v295
    %v319 = vunpack.c.l.b16 %v296
    %v320 = vunpack.c.l.b16 %v297
    %v321 = vpack.c.b16 %v314, %v313
    %v322 = vpack.c.b16 %v316, %v315
    %v323 = vpack.c.b16 %v318, %v317
    %v324 = vpack.c.b16 %v320, %v319
    %vm329 = vcmask 523264
    %v331 = vsel %vm329, %v286, 0
    %v334 = vsel %vm329, %v287, 0
    %v337 = vsel %vm329, %v288, 0
    %v340 = vsel %vm329, %v289, 0
    %342 = vmatprep.subr.bf16.mxu0 0
    %343 = vmatpush1.bf16.msra.mxu0 %v321
    %344 = vmatprep.subr.bf16.mxu0 0
    %345 = vmatpush1.bf16.msra.mxu0 %v322
    %346 = vmatprep.subr.bf16.mxu0 0
    %347 = vmatpush1.bf16.msra.mxu0 %v323
    %348 = vmatprep.subr.bf16.mxu0 0
    %349 = vmatpush1.bf16.msra.mxu0 %v324
    %350 = vmatprep.subr.bf16.mxu0 0
    %351 = vmatpush1.bf16.msra.mxu0 0
    %352 = vmatprep.subr.bf16.mxu0 0
    %353 = vmatpush1.bf16.msra.mxu0 0
    %354 = vmatprep.subr.bf16.mxu0 0
    %355 = vmatpush1.bf16.msra.mxu0 0
    %356 = vmatprep.subr.bf16.mxu0 0
    %357 = vmatpush1.bf16.msra.mxu0 0
    %358 = vmatprep.subr.bf16.mxu0 0
    %359 = vmatpush1.bf16.msra.mxu0 0
    %360 = vmatprep.subr.bf16.mxu0 0
    %361 = vmatpush1.bf16.msra.mxu0 0
    %362 = vmatprep.subr.bf16.mxu0 0
    %363 = vmatpush1.bf16.msra.mxu0 0
    %364 = vmatprep.subr.bf16.mxu0 0
    %365 = vmatpush1.bf16.msra.mxu0 0
    %366 = vmatprep.subr.bf16.mxu0 0
    %367 = vmatpush1.bf16.msra.mxu0 0
    %368 = vmatprep.subr.bf16.mxu0 0
    %369 = vmatpush1.bf16.msra.mxu0 0
    %370 = vmatprep.subr.bf16.mxu0 0
    %371 = vmatpush1.bf16.msra.mxu0 0
    %372 = vmatprep.subr.bf16.mxu0 0
    %373 = vmatpush1.bf16.msra.mxu0 0
    %374 = vmatprep.mubr.bf16.mxu0 0
    %375 = vmatmul.mubr.bf16.gmra.mrb[0].mxu0 %v331
    %v376 = vpop.f32.mrb[0].mxu0
    %v377 = vadd.f32 %v303, %v376
    %v378 = vpop.f32.mrb[0].mxu0
    %v379 = vpop.f32.mrb[0].mxu0
    %v380 = vadd.f32 %v303, %v379
    %v381 = vpop.f32.mrb[0].mxu0
    %382 = vmatprep.mubr.bf16.mxu0 0
    %383 = vmatmul.mubr.bf16.gmra.mrb[0].mxu0 %v334
    %v384 = vpop.f32.mrb[0].mxu0
    %v385 = vadd.f32 %v303, %v384
    %v386 = vpop.f32.mrb[0].mxu0
    %v387 = vpop.f32.mrb[0].mxu0
    %v388 = vadd.f32 %v303, %v387
    %v389 = vpop.f32.mrb[0].mxu0
    %390 = vmatprep.mubr.bf16.mxu0 0
    %391 = vmatmul.mubr.bf16.gmra.mrb[0].mxu0 %v337
    %v392 = vpop.f32.mrb[0].mxu0
    %v393 = vadd.f32 %v303, %v392
    %v394 = vpop.f32.mrb[0].mxu0
    %v395 = vpop.f32.mrb[0].mxu0
    %v396 = vadd.f32 %v303, %v395
    %v397 = vpop.f32.mrb[0].mxu0
    %398 = vmatprep.mubr.bf16.mxu0 0
    %399 = vmatmul.mubr.bf16.gmra.mrb[0].mxu0 %v340
    %v400 = vpop.f32.mrb[0].mxu0
    %v401 = vadd.f32 %v303, %v400
    %v402 = vpop.f32.mrb[0].mxu0
    %v403 = vpop.f32.mrb[0].mxu0
    %v404 = vadd.f32 %v303, %v403
    %v405 = vpop.f32.mrb[0].mxu0
    %406 = vdwg.mxu0
    %vm407 = vcmask 97280
    %408 = vst.msk [vmem:[#allocation2] sm:$0xff] %vm407, %v377
    %409 = vst.msk [vmem:[#allocation2 + $0x8] sm:$0xff] %vm407, %v380
    %410 = vst.msk [vmem:[#allocation2 + $0x10] sm:$0xff] %vm407, %v385
    %411 = vst.msk [vmem:[#allocation2 + $0x18] sm:$0xff] %vm407, %v388
    %412 = vst.msk [vmem:[#allocation2 + $0x20] sm:$0xff] %vm407, %v393
    %413 = vst.msk [vmem:[#allocation2 + $0x28] sm:$0xff] %vm407, %v396
    %414 = vst.msk [vmem:[#allocation2 + $0x30] sm:$0xff] %vm407, %v401
    %415 = vst.msk [vmem:[#allocation2 + $0x38] sm:$0xff] %vm407, %v404
    // Predicated region
    $region30: #{imu_noise_model_forward.1} parent=1 // pred_check
      _
    $region31: #{imu_noise_model_forward.1} parent=1 // pred_check_branch
      %417 = sbr.rel (0) target = $region33
    $region32: #{imu_noise_model_forward.1} parent=1 // pred_region
      %s419 = ssub.s32 1024, 1024
      %420 = vsyncadd [#allocation3], %s419
      %s421 = sshll.u32 [#allocation2], 4
      %s422 = int_to_ptr.vmem [resolvable:$true] %s421
      %427 = dma.vmem_to_hbm [thread:$0]  %s422, 1024, %s7, [#allocation3], 128, 128, 8
    $region33: #{imu_noise_model_forward.1} parent=1 // pred_fallthru
      _
    // Predicated region
    $region34: #{imu_noise_model_forward.1} parent=1 // pred_check
      _
    $region35: #{imu_noise_model_forward.1} parent=1 // pred_check_branch
      %429 = sbr.rel (0) target = $region37
    $region36: #{imu_noise_model_forward.1} parent=1 // pred_region
      %430 = dma.done [#allocation3], 1024
    $region37: #{imu_noise_model_forward.1} parent=1 // pred_fallthru
      _
    %431 = vsyncpa [#allocation3], 1

</llo_original>
